<compile_context>
chip_gen: v7x
topology: tpu7x:2x2x1
jax: 0.10.0
libtpu: 0.0.40
codegen_flags: <defaults>
</compile_context>

<pallas_src>
import functools

import jax
import jax.numpy as jnp
from jax.experimental import pallas as pl
from jax.experimental.pallas import tpu as pltpu

# Shapes implied by the original script: steps=16 scalar inputs, tiny MLP.
N_BATCH = 16
N_FEATURE = 1
N_HIDDEN = 32
N_OUTPUT = 1

_LANES = 128              # vreg lane width
_MAX_ROWS_PER_STEP = 64   # 64 x 128 = 8192 samples / grid step (32 KB fp32 block)


def _mlp_kernel(n_hidden, params_ref, x_ref, o_ref):
    # params_ref: SMEM f32[3*n_hidden + 1] = [w1 | b1 | w2 | b2]  (resident)
    # x_ref, o_ref: VMEM f32[rows_per_step, 128] (batch on sublanes x lanes)
    x = x_ref[...]
    acc = jnp.zeros_like(x)
    for j in range(n_hidden):                       # unrolled, static trip count
        # hidden layer (n_feature == 1): scalar-broadcast FMA on the VPU
        z = params_ref[j] * x + params_ref[n_hidden + j]
        # sigmoid on the EUP (tanh form avoids an fp32 divide on the VALU)
        hj = 0.5 * jnp.tanh(0.5 * z) + 0.5
        # predict layer (n_output == 1): scalar-weighted accumulation
        acc = acc + params_ref[2 * n_hidden + j] * hj
    o_ref[...] = acc + params_ref[3 * n_hidden]     # output bias


def net_forward(x, w1, b1, w2, b2):
    """PyTorch Net.forward: sigmoid(x @ w1.T + b1) @ w2.T + b2.

    x: [N, 1], w1: [H, 1], b1: [H], w2: [1, H], b2: [1] (PyTorch conventions).
    """
    n, f = x.shape
    h = w1.shape[0]
    o = w2.shape[0]
    assert f == 1 and o == 1, "kernel specialised for n_feature=1, n_output=1"

    # Pack all parameters into one SMEM-resident operand (single tiny DMA).
    params = jnp.concatenate(
        [w1.reshape(h), b1.reshape(h), w2.reshape(h), b2.reshape(1)]
    ).astype(jnp.float32)

    # Lane-dense batch layout: pad N to a multiple of 128 and view as
    # [rows, 128]; larger batches are tiled into (rows_per_step, 128) blocks
    # over a parallel grid axis.
    rows = pl.cdiv(n, _LANES)
    if rows <= _MAX_ROWS_PER_STEP:
        rows_per_step = rows
    else:
        rows_per_step = _MAX_ROWS_PER_STEP
        rows = ((rows + rows_per_step - 1) // rows_per_step) * rows_per_step
    n_pad = rows * _LANES
    grid = rows // rows_per_step

    x_pad = jnp.pad(x.reshape(n).astype(jnp.float32), (0, n_pad - n))
    x2d = x_pad.reshape(rows, _LANES)

    out2d = pl.pallas_call(
        functools.partial(_mlp_kernel, h),
        out_shape=jax.ShapeDtypeStruct((rows, _LANES), jnp.float32),
        grid=(grid,),
        in_specs=[
            # packed params: whole array in SMEM, resident across all grid steps
            pl.BlockSpec(memory_space=pltpu.MemorySpace.SMEM),
            # batch blocks: unmasked (rows_per_step, 128) fp32 tiles
            pl.BlockSpec((rows_per_step, _LANES), lambda i: (i, 0)),
        ],
        out_specs=pl.BlockSpec((rows_per_step, _LANES), lambda i: (i, 0)),
        compiler_params=pltpu.CompilerParams(
            dimension_semantics=("parallel",)),   # both TCs on v7x for big batches
    )(params, x2d)

    # Slice off the padded lanes and restore the [N, 1] PyTorch output shape.
    return out2d.reshape(n_pad)[:n].reshape(n, o)


def init_linear(key, out_features, in_features):
    # PyTorch nn.Linear default init: U(-1/sqrt(fan_in), 1/sqrt(fan_in))
    kw, kb = jax.random.split(key)
    bound = 1.0 / jnp.sqrt(jnp.float32(in_features))
    w = jax.random.uniform(kw, (out_features, in_features), jnp.float32, -bound, bound)
    b = jax.random.uniform(kb, (out_features,), jnp.float32, -bound, bound)
    return w, b


def _reference(x, w1, b1, w2, b2):
    return jnp.dot(jax.nn.sigmoid(jnp.dot(x, w1.T) + b1), w2.T) + b2


if __name__ == "__main__":
    key = jax.random.PRNGKey(0)
    k1, k2 = jax.random.split(key)

    w1, b1 = init_linear(k1, N_HIDDEN, N_FEATURE)
    w2, b2 = init_linear(k2, N_OUTPUT, N_HIDDEN)

    # Input analogous to np.linspace(0, 1, steps) reshaped to [steps, 1]
    x = jnp.linspace(0.0, 1.0, N_BATCH, dtype=jnp.float32).reshape(N_BATCH, N_FEATURE)

    out = jax.block_until_ready(net_forward(x, w1, b1, w2, b2))
    ref = _reference(x, w1, b1, w2, b2)
    assert out.shape == (N_BATCH, N_OUTPUT)
    assert jnp.allclose(out, ref, atol=1e-4, rtol=1e-4)

    # Also exercise the batched, multi-step (weight-resident, parallel-grid) path.
    xb = jax.random.uniform(jax.random.PRNGKey(1), (20000, N_FEATURE), jnp.float32)
    outb = jax.block_until_ready(net_forward(xb, w1, b1, w2, b2))
    refb = _reference(xb, w1, b1, w2, b2)
    assert outb.shape == (20000, N_OUTPUT)
    assert jnp.allclose(outb, refb, atol=1e-4, rtol=1e-4)

    print("KERNEL_OK")
</pallas_src>

<mosaic_0001>
module attributes {stable_mosaic.version = 11 : i64} {
  func.func @_mlp_kernel(%arg0: i32, %arg1: memref<97xf32, #tpu.memory_space<smem>>, %arg2: memref<1x128xf32, #tpu.memory_space<vmem>>, %arg3: memref<1x128xf32, #tpu.memory_space<vmem>>) attributes {dimension_semantics = [#tpu.dimension_semantics<parallel>], iteration_bounds = array<i64: 1>, scalar_prefetch = 0 : i64, scratch_operands = 0 : i64, tpu.core_type = #tpu.core_type<tc>, window_params = [{transform_indices = @transform_0, window_bounds = array<i64: 97>}, {transform_indices = @transform_1, window_bounds = array<i64: 1, 128>}, {transform_indices = @transform_2, window_bounds = array<i64: 1, 128>}]} {
    %c0 = arith.constant 0 : index
    %c0_0 = arith.constant 0 : index
    %0 = vector.load %arg2[%c0, %c0_0] : memref<1x128xf32, #tpu.memory_space<vmem>>, vector<1x128xf32>
    %cst = arith.constant 0.000000e+00 : f32
    %1 = vector.broadcast %cst : f32 to vector<1x128xf32>
    %c0_1 = arith.constant 0 : index
    %2 = memref.load %arg1[%c0_1] : memref<97xf32, #tpu.memory_space<smem>>
    %3 = vector.broadcast %2 : f32 to vector<1x128xf32>
    %4 = arith.mulf %3, %0 : vector<1x128xf32>
    %c32 = arith.constant 32 : index
    %5 = memref.load %arg1[%c32] : memref<97xf32, #tpu.memory_space<smem>>
    %6 = vector.broadcast %5 : f32 to vector<1x128xf32>
    %7 = arith.addf %4, %6 : vector<1x128xf32>
    %cst_2 = arith.constant 5.000000e-01 : f32
    %8 = vector.broadcast %cst_2 : f32 to vector<1x128xf32>
    %9 = arith.mulf %8, %7 : vector<1x128xf32>
    %10 = math.tanh %9 : vector<1x128xf32>
    %cst_3 = arith.constant 5.000000e-01 : f32
    %11 = vector.broadcast %cst_3 : f32 to vector<1x128xf32>
    %12 = arith.mulf %11, %10 : vector<1x128xf32>
    %cst_4 = arith.constant 5.000000e-01 : f32
    %13 = vector.broadcast %cst_4 : f32 to vector<1x128xf32>
    %14 = arith.addf %12, %13 : vector<1x128xf32>
    %c64 = arith.constant 64 : index
    %15 = memref.load %arg1[%c64] : memref<97xf32, #tpu.memory_space<smem>>
    %16 = vector.broadcast %15 : f32 to vector<1x128xf32>
    %17 = arith.mulf %16, %14 : vector<1x128xf32>
    %18 = arith.addf %1, %17 : vector<1x128xf32>
    %c1 = arith.constant 1 : index
    %19 = memref.load %arg1[%c1] : memref<97xf32, #tpu.memory_space<smem>>
    %20 = vector.broadcast %19 : f32 to vector<1x128xf32>
    %21 = arith.mulf %20, %0 : vector<1x128xf32>
    %c33 = arith.constant 33 : index
    %22 = memref.load %arg1[%c33] : memref<97xf32, #tpu.memory_space<smem>>
    %23 = vector.broadcast %22 : f32 to vector<1x128xf32>
    %24 = arith.addf %21, %23 : vector<1x128xf32>
    %cst_5 = arith.constant 5.000000e-01 : f32
    %25 = vector.broadcast %cst_5 : f32 to vector<1x128xf32>
    %26 = arith.mulf %25, %24 : vector<1x128xf32>
    %27 = math.tanh %26 : vector<1x128xf32>
    %cst_6 = arith.constant 5.000000e-01 : f32
    %28 = vector.broadcast %cst_6 : f32 to vector<1x128xf32>
    %29 = arith.mulf %28, %27 : vector<1x128xf32>
    %cst_7 = arith.constant 5.000000e-01 : f32
    %30 = vector.broadcast %cst_7 : f32 to vector<1x128xf32>
    %31 = arith.addf %29, %30 : vector<1x128xf32>
    %c65 = arith.constant 65 : index
    %32 = memref.load %arg1[%c65] : memref<97xf32, #tpu.memory_space<smem>>
    %33 = vector.broadcast %32 : f32 to vector<1x128xf32>
    %34 = arith.mulf %33, %31 : vector<1x128xf32>
    %35 = arith.addf %18, %34 : vector<1x128xf32>
    %c2 = arith.constant 2 : index
    %36 = memref.load %arg1[%c2] : memref<97xf32, #tpu.memory_space<smem>>
    %37 = vector.broadcast %36 : f32 to vector<1x128xf32>
    %38 = arith.mulf %37, %0 : vector<1x128xf32>
    %c34 = arith.constant 34 : index
    %39 = memref.load %arg1[%c34] : memref<97xf32, #tpu.memory_space<smem>>
    %40 = vector.broadcast %39 : f32 to vector<1x128xf32>
    %41 = arith.addf %38, %40 : vector<1x128xf32>
    %cst_8 = arith.constant 5.000000e-01 : f32
    %42 = vector.broadcast %cst_8 : f32 to vector<1x128xf32>
    %43 = arith.mulf %42, %41 : vector<1x128xf32>
    %44 = math.tanh %43 : vector<1x128xf32>
    %cst_9 = arith.constant 5.000000e-01 : f32
    %45 = vector.broadcast %cst_9 : f32 to vector<1x128xf32>
    %46 = arith.mulf %45, %44 : vector<1x128xf32>
    %cst_10 = arith.constant 5.000000e-01 : f32
    %47 = vector.broadcast %cst_10 : f32 to vector<1x128xf32>
    %48 = arith.addf %46, %47 : vector<1x128xf32>
    %c66 = arith.constant 66 : index
    %49 = memref.load %arg1[%c66] : memref<97xf32, #tpu.memory_space<smem>>
    %50 = vector.broadcast %49 : f32 to vector<1x128xf32>
    %51 = arith.mulf %50, %48 : vector<1x128xf32>
    %52 = arith.addf %35, %51 : vector<1x128xf32>
    %c3 = arith.constant 3 : index
    %53 = memref.load %arg1[%c3] : memref<97xf32, #tpu.memory_space<smem>>
    %54 = vector.broadcast %53 : f32 to vector<1x128xf32>
    %55 = arith.mulf %54, %0 : vector<1x128xf32>
    %c35 = arith.constant 35 : index
    %56 = memref.load %arg1[%c35] : memref<97xf32, #tpu.memory_space<smem>>
    %57 = vector.broadcast %56 : f32 to vector<1x128xf32>
    %58 = arith.addf %55, %57 : vector<1x128xf32>
    %cst_11 = arith.constant 5.000000e-01 : f32
    %59 = vector.broadcast %cst_11 : f32 to vector<1x128xf32>
    %60 = arith.mulf %59, %58 : vector<1x128xf32>
    %61 = math.tanh %60 : vector<1x128xf32>
    %cst_12 = arith.constant 5.000000e-01 : f32
    %62 = vector.broadcast %cst_12 : f32 to vector<1x128xf32>
    %63 = arith.mulf %62, %61 : vector<1x128xf32>
    %cst_13 = arith.constant 5.000000e-01 : f32
    %64 = vector.broadcast %cst_13 : f32 to vector<1x128xf32>
    %65 = arith.addf %63, %64 : vector<1x128xf32>
    %c67 = arith.constant 67 : index
    %66 = memref.load %arg1[%c67] : memref<97xf32, #tpu.memory_space<smem>>
    %67 = vector.broadcast %66 : f32 to vector<1x128xf32>
    %68 = arith.mulf %67, %65 : vector<1x128xf32>
    %69 = arith.addf %52, %68 : vector<1x128xf32>
    %c4 = arith.constant 4 : index
    %70 = memref.load %arg1[%c4] : memref<97xf32, #tpu.memory_space<smem>>
    %71 = vector.broadcast %70 : f32 to vector<1x128xf32>
    %72 = arith.mulf %71, %0 : vector<1x128xf32>
    %c36 = arith.constant 36 : index
    %73 = memref.load %arg1[%c36] : memref<97xf32, #tpu.memory_space<smem>>
    %74 = vector.broadcast %73 : f32 to vector<1x128xf32>
    %75 = arith.addf %72, %74 : vector<1x128xf32>
    %cst_14 = arith.constant 5.000000e-01 : f32
    %76 = vector.broadcast %cst_14 : f32 to vector<1x128xf32>
    %77 = arith.mulf %76, %75 : vector<1x128xf32>
    %78 = math.tanh %77 : vector<1x128xf32>
    %cst_15 = arith.constant 5.000000e-01 : f32
    %79 = vector.broadcast %cst_15 : f32 to vector<1x128xf32>
    %80 = arith.mulf %79, %78 : vector<1x128xf32>
    %cst_16 = arith.constant 5.000000e-01 : f32
    %81 = vector.broadcast %cst_16 : f32 to vector<1x128xf32>
    %82 = arith.addf %80, %81 : vector<1x128xf32>
    %c68 = arith.constant 68 : index
    %83 = memref.load %arg1[%c68] : memref<97xf32, #tpu.memory_space<smem>>
    %84 = vector.broadcast %83 : f32 to vector<1x128xf32>
    %85 = arith.mulf %84, %82 : vector<1x128xf32>
    %86 = arith.addf %69, %85 : vector<1x128xf32>
    %c5 = arith.constant 5 : index
    %87 = memref.load %arg1[%c5] : memref<97xf32, #tpu.memory_space<smem>>
    %88 = vector.broadcast %87 : f32 to vector<1x128xf32>
    %89 = arith.mulf %88, %0 : vector<1x128xf32>
    %c37 = arith.constant 37 : index
    %90 = memref.load %arg1[%c37] : memref<97xf32, #tpu.memory_space<smem>>
    %91 = vector.broadcast %90 : f32 to vector<1x128xf32>
    %92 = arith.addf %89, %91 : vector<1x128xf32>
    %cst_17 = arith.constant 5.000000e-01 : f32
    %93 = vector.broadcast %cst_17 : f32 to vector<1x128xf32>
    %94 = arith.mulf %93, %92 : vector<1x128xf32>
    %95 = math.tanh %94 : vector<1x128xf32>
    %cst_18 = arith.constant 5.000000e-01 : f32
    %96 = vector.broadcast %cst_18 : f32 to vector<1x128xf32>
    %97 = arith.mulf %96, %95 : vector<1x128xf32>
    %cst_19 = arith.constant 5.000000e-01 : f32
    %98 = vector.broadcast %cst_19 : f32 to vector<1x128xf32>
    %99 = arith.addf %97, %98 : vector<1x128xf32>
    %c69 = arith.constant 69 : index
    %100 = memref.load %arg1[%c69] : memref<97xf32, #tpu.memory_space<smem>>
    %101 = vector.broadcast %100 : f32 to vector<1x128xf32>
    %102 = arith.mulf %101, %99 : vector<1x128xf32>
    %103 = arith.addf %86, %102 : vector<1x128xf32>
    %c6 = arith.constant 6 : index
    %104 = memref.load %arg1[%c6] : memref<97xf32, #tpu.memory_space<smem>>
    %105 = vector.broadcast %104 : f32 to vector<1x128xf32>
    %106 = arith.mulf %105, %0 : vector<1x128xf32>
    %c38 = arith.constant 38 : index
    %107 = memref.load %arg1[%c38] : memref<97xf32, #tpu.memory_space<smem>>
    %108 = vector.broadcast %107 : f32 to vector<1x128xf32>
    %109 = arith.addf %106, %108 : vector<1x128xf32>
    %cst_20 = arith.constant 5.000000e-01 : f32
    %110 = vector.broadcast %cst_20 : f32 to vector<1x128xf32>
    %111 = arith.mulf %110, %109 : vector<1x128xf32>
    %112 = math.tanh %111 : vector<1x128xf32>
    %cst_21 = arith.constant 5.000000e-01 : f32
    %113 = vector.broadcast %cst_21 : f32 to vector<1x128xf32>
    %114 = arith.mulf %113, %112 : vector<1x128xf32>
    %cst_22 = arith.constant 5.000000e-01 : f32
    %115 = vector.broadcast %cst_22 : f32 to vector<1x128xf32>
    %116 = arith.addf %114, %115 : vector<1x128xf32>
    %c70 = arith.constant 70 : index
    %117 = memref.load %arg1[%c70] : memref<97xf32, #tpu.memory_space<smem>>
    %118 = vector.broadcast %117 : f32 to vector<1x128xf32>
    %119 = arith.mulf %118, %116 : vector<1x128xf32>
    %120 = arith.addf %103, %119 : vector<1x128xf32>
    %c7 = arith.constant 7 : index
    %121 = memref.load %arg1[%c7] : memref<97xf32, #tpu.memory_space<smem>>
    %122 = vector.broadcast %121 : f32 to vector<1x128xf32>
    %123 = arith.mulf %122, %0 : vector<1x128xf32>
    %c39 = arith.constant 39 : index
    %124 = memref.load %arg1[%c39] : memref<97xf32, #tpu.memory_space<smem>>
    %125 = vector.broadcast %124 : f32 to vector<1x128xf32>
    %126 = arith.addf %123, %125 : vector<1x128xf32>
    %cst_23 = arith.constant 5.000000e-01 : f32
    %127 = vector.broadcast %cst_23 : f32 to vector<1x128xf32>
    %128 = arith.mulf %127, %126 : vector<1x128xf32>
    %129 = math.tanh %128 : vector<1x128xf32>
    %cst_24 = arith.constant 5.000000e-01 : f32
    %130 = vector.broadcast %cst_24 : f32 to vector<1x128xf32>
    %131 = arith.mulf %130, %129 : vector<1x128xf32>
    %cst_25 = arith.constant 5.000000e-01 : f32
    %132 = vector.broadcast %cst_25 : f32 to vector<1x128xf32>
    %133 = arith.addf %131, %132 : vector<1x128xf32>
    %c71 = arith.constant 71 : index
    %134 = memref.load %arg1[%c71] : memref<97xf32, #tpu.memory_space<smem>>
    %135 = vector.broadcast %134 : f32 to vector<1x128xf32>
    %136 = arith.mulf %135, %133 : vector<1x128xf32>
    %137 = arith.addf %120, %136 : vector<1x128xf32>
    %c8 = arith.constant 8 : index
    %138 = memref.load %arg1[%c8] : memref<97xf32, #tpu.memory_space<smem>>
    %139 = vector.broadcast %138 : f32 to vector<1x128xf32>
    %140 = arith.mulf %139, %0 : vector<1x128xf32>
    %c40 = arith.constant 40 : index
    %141 = memref.load %arg1[%c40] : memref<97xf32, #tpu.memory_space<smem>>
    %142 = vector.broadcast %141 : f32 to vector<1x128xf32>
    %143 = arith.addf %140, %142 : vector<1x128xf32>
    %cst_26 = arith.constant 5.000000e-01 : f32
    %144 = vector.broadcast %cst_26 : f32 to vector<1x128xf32>
    %145 = arith.mulf %144, %143 : vector<1x128xf32>
    %146 = math.tanh %145 : vector<1x128xf32>
    %cst_27 = arith.constant 5.000000e-01 : f32
    %147 = vector.broadcast %cst_27 : f32 to vector<1x128xf32>
    %148 = arith.mulf %147, %146 : vector<1x128xf32>
    %cst_28 = arith.constant 5.000000e-01 : f32
    %149 = vector.broadcast %cst_28 : f32 to vector<1x128xf32>
    %150 = arith.addf %148, %149 : vector<1x128xf32>
    %c72 = arith.constant 72 : index
    %151 = memref.load %arg1[%c72] : memref<97xf32, #tpu.memory_space<smem>>
    %152 = vector.broadcast %151 : f32 to vector<1x128xf32>
    %153 = arith.mulf %152, %150 : vector<1x128xf32>
    %154 = arith.addf %137, %153 : vector<1x128xf32>
    %c9 = arith.constant 9 : index
    %155 = memref.load %arg1[%c9] : memref<97xf32, #tpu.memory_space<smem>>
    %156 = vector.broadcast %155 : f32 to vector<1x128xf32>
    %157 = arith.mulf %156, %0 : vector<1x128xf32>
    %c41 = arith.constant 41 : index
    %158 = memref.load %arg1[%c41] : memref<97xf32, #tpu.memory_space<smem>>
    %159 = vector.broadcast %158 : f32 to vector<1x128xf32>
    %160 = arith.addf %157, %159 : vector<1x128xf32>
    %cst_29 = arith.constant 5.000000e-01 : f32
    %161 = vector.broadcast %cst_29 : f32 to vector<1x128xf32>
    %162 = arith.mulf %161, %160 : vector<1x128xf32>
    %163 = math.tanh %162 : vector<1x128xf32>
    %cst_30 = arith.constant 5.000000e-01 : f32
    %164 = vector.broadcast %cst_30 : f32 to vector<1x128xf32>
    %165 = arith.mulf %164, %163 : vector<1x128xf32>
    %cst_31 = arith.constant 5.000000e-01 : f32
    %166 = vector.broadcast %cst_31 : f32 to vector<1x128xf32>
    %167 = arith.addf %165, %166 : vector<1x128xf32>
    %c73 = arith.constant 73 : index
    %168 = memref.load %arg1[%c73] : memref<97xf32, #tpu.memory_space<smem>>
    %169 = vector.broadcast %168 : f32 to vector<1x128xf32>
    %170 = arith.mulf %169, %167 : vector<1x128xf32>
    %171 = arith.addf %154, %170 : vector<1x128xf32>
    %c10 = arith.constant 10 : index
    %172 = memref.load %arg1[%c10] : memref<97xf32, #tpu.memory_space<smem>>
    %173 = vector.broadcast %172 : f32 to vector<1x128xf32>
    %174 = arith.mulf %173, %0 : vector<1x128xf32>
    %c42 = arith.constant 42 : index
    %175 = memref.load %arg1[%c42] : memref<97xf32, #tpu.memory_space<smem>>
    %176 = vector.broadcast %175 : f32 to vector<1x128xf32>
    %177 = arith.addf %174, %176 : vector<1x128xf32>
    %cst_32 = arith.constant 5.000000e-01 : f32
    %178 = vector.broadcast %cst_32 : f32 to vector<1x128xf32>
    %179 = arith.mulf %178, %177 : vector<1x128xf32>
    %180 = math.tanh %179 : vector<1x128xf32>
    %cst_33 = arith.constant 5.000000e-01 : f32
    %181 = vector.broadcast %cst_33 : f32 to vector<1x128xf32>
    %182 = arith.mulf %181, %180 : vector<1x128xf32>
    %cst_34 = arith.constant 5.000000e-01 : f32
    %183 = vector.broadcast %cst_34 : f32 to vector<1x128xf32>
    %184 = arith.addf %182, %183 : vector<1x128xf32>
    %c74 = arith.constant 74 : index
    %185 = memref.load %arg1[%c74] : memref<97xf32, #tpu.memory_space<smem>>
    %186 = vector.broadcast %185 : f32 to vector<1x128xf32>
    %187 = arith.mulf %186, %184 : vector<1x128xf32>
    %188 = arith.addf %171, %187 : vector<1x128xf32>
    %c11 = arith.constant 11 : index
    %189 = memref.load %arg1[%c11] : memref<97xf32, #tpu.memory_space<smem>>
    %190 = vector.broadcast %189 : f32 to vector<1x128xf32>
    %191 = arith.mulf %190, %0 : vector<1x128xf32>
    %c43 = arith.constant 43 : index
    %192 = memref.load %arg1[%c43] : memref<97xf32, #tpu.memory_space<smem>>
    %193 = vector.broadcast %192 : f32 to vector<1x128xf32>
    %194 = arith.addf %191, %193 : vector<1x128xf32>
    %cst_35 = arith.constant 5.000000e-01 : f32
    %195 = vector.broadcast %cst_35 : f32 to vector<1x128xf32>
    %196 = arith.mulf %195, %194 : vector<1x128xf32>
    %197 = math.tanh %196 : vector<1x128xf32>
    %cst_36 = arith.constant 5.000000e-01 : f32
    %198 = vector.broadcast %cst_36 : f32 to vector<1x128xf32>
    %199 = arith.mulf %198, %197 : vector<1x128xf32>
    %cst_37 = arith.constant 5.000000e-01 : f32
    %200 = vector.broadcast %cst_37 : f32 to vector<1x128xf32>
    %201 = arith.addf %199, %200 : vector<1x128xf32>
    %c75 = arith.constant 75 : index
    %202 = memref.load %arg1[%c75] : memref<97xf32, #tpu.memory_space<smem>>
    %203 = vector.broadcast %202 : f32 to vector<1x128xf32>
    %204 = arith.mulf %203, %201 : vector<1x128xf32>
    %205 = arith.addf %188, %204 : vector<1x128xf32>
    %c12 = arith.constant 12 : index
    %206 = memref.load %arg1[%c12] : memref<97xf32, #tpu.memory_space<smem>>
    %207 = vector.broadcast %206 : f32 to vector<1x128xf32>
    %208 = arith.mulf %207, %0 : vector<1x128xf32>
    %c44 = arith.constant 44 : index
    %209 = memref.load %arg1[%c44] : memref<97xf32, #tpu.memory_space<smem>>
    %210 = vector.broadcast %209 : f32 to vector<1x128xf32>
    %211 = arith.addf %208, %210 : vector<1x128xf32>
    %cst_38 = arith.constant 5.000000e-01 : f32
    %212 = vector.broadcast %cst_38 : f32 to vector<1x128xf32>
    %213 = arith.mulf %212, %211 : vector<1x128xf32>
    %214 = math.tanh %213 : vector<1x128xf32>
    %cst_39 = arith.constant 5.000000e-01 : f32
    %215 = vector.broadcast %cst_39 : f32 to vector<1x128xf32>
    %216 = arith.mulf %215, %214 : vector<1x128xf32>
    %cst_40 = arith.constant 5.000000e-01 : f32
    %217 = vector.broadcast %cst_40 : f32 to vector<1x128xf32>
    %218 = arith.addf %216, %217 : vector<1x128xf32>
    %c76 = arith.constant 76 : index
    %219 = memref.load %arg1[%c76] : memref<97xf32, #tpu.memory_space<smem>>
    %220 = vector.broadcast %219 : f32 to vector<1x128xf32>
    %221 = arith.mulf %220, %218 : vector<1x128xf32>
    %222 = arith.addf %205, %221 : vector<1x128xf32>
    %c13 = arith.constant 13 : index
    %223 = memref.load %arg1[%c13] : memref<97xf32, #tpu.memory_space<smem>>
    %224 = vector.broadcast %223 : f32 to vector<1x128xf32>
    %225 = arith.mulf %224, %0 : vector<1x128xf32>
    %c45 = arith.constant 45 : index
    %226 = memref.load %arg1[%c45] : memref<97xf32, #tpu.memory_space<smem>>
    %227 = vector.broadcast %226 : f32 to vector<1x128xf32>
    %228 = arith.addf %225, %227 : vector<1x128xf32>
    %cst_41 = arith.constant 5.000000e-01 : f32
    %229 = vector.broadcast %cst_41 : f32 to vector<1x128xf32>
    %230 = arith.mulf %229, %228 : vector<1x128xf32>
    %231 = math.tanh %230 : vector<1x128xf32>
    %cst_42 = arith.constant 5.000000e-01 : f32
    %232 = vector.broadcast %cst_42 : f32 to vector<1x128xf32>
    %233 = arith.mulf %232, %231 : vector<1x128xf32>
    %cst_43 = arith.constant 5.000000e-01 : f32
    %234 = vector.broadcast %cst_43 : f32 to vector<1x128xf32>
    %235 = arith.addf %233, %234 : vector<1x128xf32>
    %c77 = arith.constant 77 : index
    %236 = memref.load %arg1[%c77] : memref<97xf32, #tpu.memory_space<smem>>
    %237 = vector.broadcast %236 : f32 to vector<1x128xf32>
    %238 = arith.mulf %237, %235 : vector<1x128xf32>
    %239 = arith.addf %222, %238 : vector<1x128xf32>
    %c14 = arith.constant 14 : index
    %240 = memref.load %arg1[%c14] : memref<97xf32, #tpu.memory_space<smem>>
    %241 = vector.broadcast %240 : f32 to vector<1x128xf32>
    %242 = arith.mulf %241, %0 : vector<1x128xf32>
    %c46 = arith.constant 46 : index
    %243 = memref.load %arg1[%c46] : memref<97xf32, #tpu.memory_space<smem>>
    %244 = vector.broadcast %243 : f32 to vector<1x128xf32>
    %245 = arith.addf %242, %244 : vector<1x128xf32>
    %cst_44 = arith.constant 5.000000e-01 : f32
    %246 = vector.broadcast %cst_44 : f32 to vector<1x128xf32>
    %247 = arith.mulf %246, %245 : vector<1x128xf32>
    %248 = math.tanh %247 : vector<1x128xf32>
    %cst_45 = arith.constant 5.000000e-01 : f32
    %249 = vector.broadcast %cst_45 : f32 to vector<1x128xf32>
    %250 = arith.mulf %249, %248 : vector<1x128xf32>
    %cst_46 = arith.constant 5.000000e-01 : f32
    %251 = vector.broadcast %cst_46 : f32 to vector<1x128xf32>
    %252 = arith.addf %250, %251 : vector<1x128xf32>
    %c78 = arith.constant 78 : index
    %253 = memref.load %arg1[%c78] : memref<97xf32, #tpu.memory_space<smem>>
    %254 = vector.broadcast %253 : f32 to vector<1x128xf32>
    %255 = arith.mulf %254, %252 : vector<1x128xf32>
    %256 = arith.addf %239, %255 : vector<1x128xf32>
    %c15 = arith.constant 15 : index
    %257 = memref.load %arg1[%c15] : memref<97xf32, #tpu.memory_space<smem>>
    %258 = vector.broadcast %257 : f32 to vector<1x128xf32>
    %259 = arith.mulf %258, %0 : vector<1x128xf32>
    %c47 = arith.constant 47 : index
    %260 = memref.load %arg1[%c47] : memref<97xf32, #tpu.memory_space<smem>>
    %261 = vector.broadcast %260 : f32 to vector<1x128xf32>
    %262 = arith.addf %259, %261 : vector<1x128xf32>
    %cst_47 = arith.constant 5.000000e-01 : f32
    %263 = vector.broadcast %cst_47 : f32 to vector<1x128xf32>
    %264 = arith.mulf %263, %262 : vector<1x128xf32>
    %265 = math.tanh %264 : vector<1x128xf32>
    %cst_48 = arith.constant 5.000000e-01 : f32
    %266 = vector.broadcast %cst_48 : f32 to vector<1x128xf32>
    %267 = arith.mulf %266, %265 : vector<1x128xf32>
    %cst_49 = arith.constant 5.000000e-01 : f32
    %268 = vector.broadcast %cst_49 : f32 to vector<1x128xf32>
    %269 = arith.addf %267, %268 : vector<1x128xf32>
    %c79 = arith.constant 79 : index
    %270 = memref.load %arg1[%c79] : memref<97xf32, #tpu.memory_space<smem>>
    %271 = vector.broadcast %270 : f32 to vector<1x128xf32>
    %272 = arith.mulf %271, %269 : vector<1x128xf32>
    %273 = arith.addf %256, %272 : vector<1x128xf32>
    %c16 = arith.constant 16 : index
    %274 = memref.load %arg1[%c16] : memref<97xf32, #tpu.memory_space<smem>>
    %275 = vector.broadcast %274 : f32 to vector<1x128xf32>
    %276 = arith.mulf %275, %0 : vector<1x128xf32>
    %c48 = arith.constant 48 : index
    %277 = memref.load %arg1[%c48] : memref<97xf32, #tpu.memory_space<smem>>
    %278 = vector.broadcast %277 : f32 to vector<1x128xf32>
    %279 = arith.addf %276, %278 : vector<1x128xf32>
    %cst_50 = arith.constant 5.000000e-01 : f32
    %280 = vector.broadcast %cst_50 : f32 to vector<1x128xf32>
    %281 = arith.mulf %280, %279 : vector<1x128xf32>
    %282 = math.tanh %281 : vector<1x128xf32>
    %cst_51 = arith.constant 5.000000e-01 : f32
    %283 = vector.broadcast %cst_51 : f32 to vector<1x128xf32>
    %284 = arith.mulf %283, %282 : vector<1x128xf32>
    %cst_52 = arith.constant 5.000000e-01 : f32
    %285 = vector.broadcast %cst_52 : f32 to vector<1x128xf32>
    %286 = arith.addf %284, %285 : vector<1x128xf32>
    %c80 = arith.constant 80 : index
    %287 = memref.load %arg1[%c80] : memref<97xf32, #tpu.memory_space<smem>>
    %288 = vector.broadcast %287 : f32 to vector<1x128xf32>
    %289 = arith.mulf %288, %286 : vector<1x128xf32>
    %290 = arith.addf %273, %289 : vector<1x128xf32>
    %c17 = arith.constant 17 : index
    %291 = memref.load %arg1[%c17] : memref<97xf32, #tpu.memory_space<smem>>
    %292 = vector.broadcast %291 : f32 to vector<1x128xf32>
    %293 = arith.mulf %292, %0 : vector<1x128xf32>
    %c49 = arith.constant 49 : index
    %294 = memref.load %arg1[%c49] : memref<97xf32, #tpu.memory_space<smem>>
    %295 = vector.broadcast %294 : f32 to vector<1x128xf32>
    %296 = arith.addf %293, %295 : vector<1x128xf32>
    %cst_53 = arith.constant 5.000000e-01 : f32
    %297 = vector.broadcast %cst_53 : f32 to vector<1x128xf32>
    %298 = arith.mulf %297, %296 : vector<1x128xf32>
    %299 = math.tanh %298 : vector<1x128xf32>
    %cst_54 = arith.constant 5.000000e-01 : f32
    %300 = vector.broadcast %cst_54 : f32 to vector<1x128xf32>
    %301 = arith.mulf %300, %299 : vector<1x128xf32>
    %cst_55 = arith.constant 5.000000e-01 : f32
    %302 = vector.broadcast %cst_55 : f32 to vector<1x128xf32>
    %303 = arith.addf %301, %302 : vector<1x128xf32>
    %c81 = arith.constant 81 : index
    %304 = memref.load %arg1[%c81] : memref<97xf32, #tpu.memory_space<smem>>
    %305 = vector.broadcast %304 : f32 to vector<1x128xf32>
    %306 = arith.mulf %305, %303 : vector<1x128xf32>
    %307 = arith.addf %290, %306 : vector<1x128xf32>
    %c18 = arith.constant 18 : index
    %308 = memref.load %arg1[%c18] : memref<97xf32, #tpu.memory_space<smem>>
    %309 = vector.broadcast %308 : f32 to vector<1x128xf32>
    %310 = arith.mulf %309, %0 : vector<1x128xf32>
    %c50 = arith.constant 50 : index
    %311 = memref.load %arg1[%c50] : memref<97xf32, #tpu.memory_space<smem>>
    %312 = vector.broadcast %311 : f32 to vector<1x128xf32>
    %313 = arith.addf %310, %312 : vector<1x128xf32>
    %cst_56 = arith.constant 5.000000e-01 : f32
    %314 = vector.broadcast %cst_56 : f32 to vector<1x128xf32>
    %315 = arith.mulf %314, %313 : vector<1x128xf32>
    %316 = math.tanh %315 : vector<1x128xf32>
    %cst_57 = arith.constant 5.000000e-01 : f32
    %317 = vector.broadcast %cst_57 : f32 to vector<1x128xf32>
    %318 = arith.mulf %317, %316 : vector<1x128xf32>
    %cst_58 = arith.constant 5.000000e-01 : f32
    %319 = vector.broadcast %cst_58 : f32 to vector<1x128xf32>
    %320 = arith.addf %318, %319 : vector<1x128xf32>
    %c82 = arith.constant 82 : index
    %321 = memref.load %arg1[%c82] : memref<97xf32, #tpu.memory_space<smem>>
    %322 = vector.broadcast %321 : f32 to vector<1x128xf32>
    %323 = arith.mulf %322, %320 : vector<1x128xf32>
    %324 = arith.addf %307, %323 : vector<1x128xf32>
    %c19 = arith.constant 19 : index
    %325 = memref.load %arg1[%c19] : memref<97xf32, #tpu.memory_space<smem>>
    %326 = vector.broadcast %325 : f32 to vector<1x128xf32>
    %327 = arith.mulf %326, %0 : vector<1x128xf32>
    %c51 = arith.constant 51 : index
    %328 = memref.load %arg1[%c51] : memref<97xf32, #tpu.memory_space<smem>>
    %329 = vector.broadcast %328 : f32 to vector<1x128xf32>
    %330 = arith.addf %327, %329 : vector<1x128xf32>
    %cst_59 = arith.constant 5.000000e-01 : f32
    %331 = vector.broadcast %cst_59 : f32 to vector<1x128xf32>
    %332 = arith.mulf %331, %330 : vector<1x128xf32>
    %333 = math.tanh %332 : vector<1x128xf32>
    %cst_60 = arith.constant 5.000000e-01 : f32
    %334 = vector.broadcast %cst_60 : f32 to vector<1x128xf32>
    %335 = arith.mulf %334, %333 : vector<1x128xf32>
    %cst_61 = arith.constant 5.000000e-01 : f32
    %336 = vector.broadcast %cst_61 : f32 to vector<1x128xf32>
    %337 = arith.addf %335, %336 : vector<1x128xf32>
    %c83 = arith.constant 83 : index
    %338 = memref.load %arg1[%c83] : memref<97xf32, #tpu.memory_space<smem>>
    %339 = vector.broadcast %338 : f32 to vector<1x128xf32>
    %340 = arith.mulf %339, %337 : vector<1x128xf32>
    %341 = arith.addf %324, %340 : vector<1x128xf32>
    %c20 = arith.constant 20 : index
    %342 = memref.load %arg1[%c20] : memref<97xf32, #tpu.memory_space<smem>>
    %343 = vector.broadcast %342 : f32 to vector<1x128xf32>
    %344 = arith.mulf %343, %0 : vector<1x128xf32>
    %c52 = arith.constant 52 : index
    %345 = memref.load %arg1[%c52] : memref<97xf32, #tpu.memory_space<smem>>
    %346 = vector.broadcast %345 : f32 to vector<1x128xf32>
    %347 = arith.addf %344, %346 : vector<1x128xf32>
    %cst_62 = arith.constant 5.000000e-01 : f32
    %348 = vector.broadcast %cst_62 : f32 to vector<1x128xf32>
    %349 = arith.mulf %348, %347 : vector<1x128xf32>
    %350 = math.tanh %349 : vector<1x128xf32>
    %cst_63 = arith.constant 5.000000e-01 : f32
    %351 = vector.broadcast %cst_63 : f32 to vector<1x128xf32>
    %352 = arith.mulf %351, %350 : vector<1x128xf32>
    %cst_64 = arith.constant 5.000000e-01 : f32
    %353 = vector.broadcast %cst_64 : f32 to vector<1x128xf32>
    %354 = arith.addf %352, %353 : vector<1x128xf32>
    %c84 = arith.constant 84 : index
    %355 = memref.load %arg1[%c84] : memref<97xf32, #tpu.memory_space<smem>>
    %356 = vector.broadcast %355 : f32 to vector<1x128xf32>
    %357 = arith.mulf %356, %354 : vector<1x128xf32>
    %358 = arith.addf %341, %357 : vector<1x128xf32>
    %c21 = arith.constant 21 : index
    %359 = memref.load %arg1[%c21] : memref<97xf32, #tpu.memory_space<smem>>
    %360 = vector.broadcast %359 : f32 to vector<1x128xf32>
    %361 = arith.mulf %360, %0 : vector<1x128xf32>
    %c53 = arith.constant 53 : index
    %362 = memref.load %arg1[%c53] : memref<97xf32, #tpu.memory_space<smem>>
    %363 = vector.broadcast %362 : f32 to vector<1x128xf32>
    %364 = arith.addf %361, %363 : vector<1x128xf32>
    %cst_65 = arith.constant 5.000000e-01 : f32
    %365 = vector.broadcast %cst_65 : f32 to vector<1x128xf32>
    %366 = arith.mulf %365, %364 : vector<1x128xf32>
    %367 = math.tanh %366 : vector<1x128xf32>
    %cst_66 = arith.constant 5.000000e-01 : f32
    %368 = vector.broadcast %cst_66 : f32 to vector<1x128xf32>
    %369 = arith.mulf %368, %367 : vector<1x128xf32>
    %cst_67 = arith.constant 5.000000e-01 : f32
    %370 = vector.broadcast %cst_67 : f32 to vector<1x128xf32>
    %371 = arith.addf %369, %370 : vector<1x128xf32>
    %c85 = arith.constant 85 : index
    %372 = memref.load %arg1[%c85] : memref<97xf32, #tpu.memory_space<smem>>
    %373 = vector.broadcast %372 : f32 to vector<1x128xf32>
    %374 = arith.mulf %373, %371 : vector<1x128xf32>
    %375 = arith.addf %358, %374 : vector<1x128xf32>
    %c22 = arith.constant 22 : index
    %376 = memref.load %arg1[%c22] : memref<97xf32, #tpu.memory_space<smem>>
    %377 = vector.broadcast %376 : f32 to vector<1x128xf32>
    %378 = arith.mulf %377, %0 : vector<1x128xf32>
    %c54 = arith.constant 54 : index
    %379 = memref.load %arg1[%c54] : memref<97xf32, #tpu.memory_space<smem>>
    %380 = vector.broadcast %379 : f32 to vector<1x128xf32>
    %381 = arith.addf %378, %380 : vector<1x128xf32>
    %cst_68 = arith.constant 5.000000e-01 : f32
    %382 = vector.broadcast %cst_68 : f32 to vector<1x128xf32>
    %383 = arith.mulf %382, %381 : vector<1x128xf32>
    %384 = math.tanh %383 : vector<1x128xf32>
    %cst_69 = arith.constant 5.000000e-01 : f32
    %385 = vector.broadcast %cst_69 : f32 to vector<1x128xf32>
    %386 = arith.mulf %385, %384 : vector<1x128xf32>
    %cst_70 = arith.constant 5.000000e-01 : f32
    %387 = vector.broadcast %cst_70 : f32 to vector<1x128xf32>
    %388 = arith.addf %386, %387 : vector<1x128xf32>
    %c86 = arith.constant 86 : index
    %389 = memref.load %arg1[%c86] : memref<97xf32, #tpu.memory_space<smem>>
    %390 = vector.broadcast %389 : f32 to vector<1x128xf32>
    %391 = arith.mulf %390, %388 : vector<1x128xf32>
    %392 = arith.addf %375, %391 : vector<1x128xf32>
    %c23 = arith.constant 23 : index
    %393 = memref.load %arg1[%c23] : memref<97xf32, #tpu.memory_space<smem>>
    %394 = vector.broadcast %393 : f32 to vector<1x128xf32>
    %395 = arith.mulf %394, %0 : vector<1x128xf32>
    %c55 = arith.constant 55 : index
    %396 = memref.load %arg1[%c55] : memref<97xf32, #tpu.memory_space<smem>>
    %397 = vector.broadcast %396 : f32 to vector<1x128xf32>
    %398 = arith.addf %395, %397 : vector<1x128xf32>
    %cst_71 = arith.constant 5.000000e-01 : f32
    %399 = vector.broadcast %cst_71 : f32 to vector<1x128xf32>
    %400 = arith.mulf %399, %398 : vector<1x128xf32>
    %401 = math.tanh %400 : vector<1x128xf32>
    %cst_72 = arith.constant 5.000000e-01 : f32
    %402 = vector.broadcast %cst_72 : f32 to vector<1x128xf32>
    %403 = arith.mulf %402, %401 : vector<1x128xf32>
    %cst_73 = arith.constant 5.000000e-01 : f32
    %404 = vector.broadcast %cst_73 : f32 to vector<1x128xf32>
    %405 = arith.addf %403, %404 : vector<1x128xf32>
    %c87 = arith.constant 87 : index
    %406 = memref.load %arg1[%c87] : memref<97xf32, #tpu.memory_space<smem>>
    %407 = vector.broadcast %406 : f32 to vector<1x128xf32>
    %408 = arith.mulf %407, %405 : vector<1x128xf32>
    %409 = arith.addf %392, %408 : vector<1x128xf32>
    %c24 = arith.constant 24 : index
    %410 = memref.load %arg1[%c24] : memref<97xf32, #tpu.memory_space<smem>>
    %411 = vector.broadcast %410 : f32 to vector<1x128xf32>
    %412 = arith.mulf %411, %0 : vector<1x128xf32>
    %c56 = arith.constant 56 : index
    %413 = memref.load %arg1[%c56] : memref<97xf32, #tpu.memory_space<smem>>
    %414 = vector.broadcast %413 : f32 to vector<1x128xf32>
    %415 = arith.addf %412, %414 : vector<1x128xf32>
    %cst_74 = arith.constant 5.000000e-01 : f32
    %416 = vector.broadcast %cst_74 : f32 to vector<1x128xf32>
    %417 = arith.mulf %416, %415 : vector<1x128xf32>
    %418 = math.tanh %417 : vector<1x128xf32>
    %cst_75 = arith.constant 5.000000e-01 : f32
    %419 = vector.broadcast %cst_75 : f32 to vector<1x128xf32>
    %420 = arith.mulf %419, %418 : vector<1x128xf32>
    %cst_76 = arith.constant 5.000000e-01 : f32
    %421 = vector.broadcast %cst_76 : f32 to vector<1x128xf32>
    %422 = arith.addf %420, %421 : vector<1x128xf32>
    %c88 = arith.constant 88 : index
    %423 = memref.load %arg1[%c88] : memref<97xf32, #tpu.memory_space<smem>>
    %424 = vector.broadcast %423 : f32 to vector<1x128xf32>
    %425 = arith.mulf %424, %422 : vector<1x128xf32>
    %426 = arith.addf %409, %425 : vector<1x128xf32>
    %c25 = arith.constant 25 : index
    %427 = memref.load %arg1[%c25] : memref<97xf32, #tpu.memory_space<smem>>
    %428 = vector.broadcast %427 : f32 to vector<1x128xf32>
    %429 = arith.mulf %428, %0 : vector<1x128xf32>
    %c57 = arith.constant 57 : index
    %430 = memref.load %arg1[%c57] : memref<97xf32, #tpu.memory_space<smem>>
    %431 = vector.broadcast %430 : f32 to vector<1x128xf32>
    %432 = arith.addf %429, %431 : vector<1x128xf32>
    %cst_77 = arith.constant 5.000000e-01 : f32
    %433 = vector.broadcast %cst_77 : f32 to vector<1x128xf32>
    %434 = arith.mulf %433, %432 : vector<1x128xf32>
    %435 = math.tanh %434 : vector<1x128xf32>
    %cst_78 = arith.constant 5.000000e-01 : f32
    %436 = vector.broadcast %cst_78 : f32 to vector<1x128xf32>
    %437 = arith.mulf %436, %435 : vector<1x128xf32>
    %cst_79 = arith.constant 5.000000e-01 : f32
    %438 = vector.broadcast %cst_79 : f32 to vector<1x128xf32>
    %439 = arith.addf %437, %438 : vector<1x128xf32>
    %c89 = arith.constant 89 : index
    %440 = memref.load %arg1[%c89] : memref<97xf32, #tpu.memory_space<smem>>
    %441 = vector.broadcast %440 : f32 to vector<1x128xf32>
    %442 = arith.mulf %441, %439 : vector<1x128xf32>
    %443 = arith.addf %426, %442 : vector<1x128xf32>
    %c26 = arith.constant 26 : index
    %444 = memref.load %arg1[%c26] : memref<97xf32, #tpu.memory_space<smem>>
    %445 = vector.broadcast %444 : f32 to vector<1x128xf32>
    %446 = arith.mulf %445, %0 : vector<1x128xf32>
    %c58 = arith.constant 58 : index
    %447 = memref.load %arg1[%c58] : memref<97xf32, #tpu.memory_space<smem>>
    %448 = vector.broadcast %447 : f32 to vector<1x128xf32>
    %449 = arith.addf %446, %448 : vector<1x128xf32>
    %cst_80 = arith.constant 5.000000e-01 : f32
    %450 = vector.broadcast %cst_80 : f32 to vector<1x128xf32>
    %451 = arith.mulf %450, %449 : vector<1x128xf32>
    %452 = math.tanh %451 : vector<1x128xf32>
    %cst_81 = arith.constant 5.000000e-01 : f32
    %453 = vector.broadcast %cst_81 : f32 to vector<1x128xf32>
    %454 = arith.mulf %453, %452 : vector<1x128xf32>
    %cst_82 = arith.constant 5.000000e-01 : f32
    %455 = vector.broadcast %cst_82 : f32 to vector<1x128xf32>
    %456 = arith.addf %454, %455 : vector<1x128xf32>
    %c90 = arith.constant 90 : index
    %457 = memref.load %arg1[%c90] : memref<97xf32, #tpu.memory_space<smem>>
    %458 = vector.broadcast %457 : f32 to vector<1x128xf32>
    %459 = arith.mulf %458, %456 : vector<1x128xf32>
    %460 = arith.addf %443, %459 : vector<1x128xf32>
    %c27 = arith.constant 27 : index
    %461 = memref.load %arg1[%c27] : memref<97xf32, #tpu.memory_space<smem>>
    %462 = vector.broadcast %461 : f32 to vector<1x128xf32>
    %463 = arith.mulf %462, %0 : vector<1x128xf32>
    %c59 = arith.constant 59 : index
    %464 = memref.load %arg1[%c59] : memref<97xf32, #tpu.memory_space<smem>>
    %465 = vector.broadcast %464 : f32 to vector<1x128xf32>
    %466 = arith.addf %463, %465 : vector<1x128xf32>
    %cst_83 = arith.constant 5.000000e-01 : f32
    %467 = vector.broadcast %cst_83 : f32 to vector<1x128xf32>
    %468 = arith.mulf %467, %466 : vector<1x128xf32>
    %469 = math.tanh %468 : vector<1x128xf32>
    %cst_84 = arith.constant 5.000000e-01 : f32
    %470 = vector.broadcast %cst_84 : f32 to vector<1x128xf32>
    %471 = arith.mulf %470, %469 : vector<1x128xf32>
    %cst_85 = arith.constant 5.000000e-01 : f32
    %472 = vector.broadcast %cst_85 : f32 to vector<1x128xf32>
    %473 = arith.addf %471, %472 : vector<1x128xf32>
    %c91 = arith.constant 91 : index
    %474 = memref.load %arg1[%c91] : memref<97xf32, #tpu.memory_space<smem>>
    %475 = vector.broadcast %474 : f32 to vector<1x128xf32>
    %476 = arith.mulf %475, %473 : vector<1x128xf32>
    %477 = arith.addf %460, %476 : vector<1x128xf32>
    %c28 = arith.constant 28 : index
    %478 = memref.load %arg1[%c28] : memref<97xf32, #tpu.memory_space<smem>>
    %479 = vector.broadcast %478 : f32 to vector<1x128xf32>
    %480 = arith.mulf %479, %0 : vector<1x128xf32>
    %c60 = arith.constant 60 : index
    %481 = memref.load %arg1[%c60] : memref<97xf32, #tpu.memory_space<smem>>
    %482 = vector.broadcast %481 : f32 to vector<1x128xf32>
    %483 = arith.addf %480, %482 : vector<1x128xf32>
    %cst_86 = arith.constant 5.000000e-01 : f32
    %484 = vector.broadcast %cst_86 : f32 to vector<1x128xf32>
    %485 = arith.mulf %484, %483 : vector<1x128xf32>
    %486 = math.tanh %485 : vector<1x128xf32>
    %cst_87 = arith.constant 5.000000e-01 : f32
    %487 = vector.broadcast %cst_87 : f32 to vector<1x128xf32>
    %488 = arith.mulf %487, %486 : vector<1x128xf32>
    %cst_88 = arith.constant 5.000000e-01 : f32
    %489 = vector.broadcast %cst_88 : f32 to vector<1x128xf32>
    %490 = arith.addf %488, %489 : vector<1x128xf32>
    %c92 = arith.constant 92 : index
    %491 = memref.load %arg1[%c92] : memref<97xf32, #tpu.memory_space<smem>>
    %492 = vector.broadcast %491 : f32 to vector<1x128xf32>
    %493 = arith.mulf %492, %490 : vector<1x128xf32>
    %494 = arith.addf %477, %493 : vector<1x128xf32>
    %c29 = arith.constant 29 : index
    %495 = memref.load %arg1[%c29] : memref<97xf32, #tpu.memory_space<smem>>
    %496 = vector.broadcast %495 : f32 to vector<1x128xf32>
    %497 = arith.mulf %496, %0 : vector<1x128xf32>
    %c61 = arith.constant 61 : index
    %498 = memref.load %arg1[%c61] : memref<97xf32, #tpu.memory_space<smem>>
    %499 = vector.broadcast %498 : f32 to vector<1x128xf32>
    %500 = arith.addf %497, %499 : vector<1x128xf32>
    %cst_89 = arith.constant 5.000000e-01 : f32
    %501 = vector.broadcast %cst_89 : f32 to vector<1x128xf32>
    %502 = arith.mulf %501, %500 : vector<1x128xf32>
    %503 = math.tanh %502 : vector<1x128xf32>
    %cst_90 = arith.constant 5.000000e-01 : f32
    %504 = vector.broadcast %cst_90 : f32 to vector<1x128xf32>
    %505 = arith.mulf %504, %503 : vector<1x128xf32>
    %cst_91 = arith.constant 5.000000e-01 : f32
    %506 = vector.broadcast %cst_91 : f32 to vector<1x128xf32>
    %507 = arith.addf %505, %506 : vector<1x128xf32>
    %c93 = arith.constant 93 : index
    %508 = memref.load %arg1[%c93] : memref<97xf32, #tpu.memory_space<smem>>
    %509 = vector.broadcast %508 : f32 to vector<1x128xf32>
    %510 = arith.mulf %509, %507 : vector<1x128xf32>
    %511 = arith.addf %494, %510 : vector<1x128xf32>
    %c30 = arith.constant 30 : index
    %512 = memref.load %arg1[%c30] : memref<97xf32, #tpu.memory_space<smem>>
    %513 = vector.broadcast %512 : f32 to vector<1x128xf32>
    %514 = arith.mulf %513, %0 : vector<1x128xf32>
    %c62 = arith.constant 62 : index
    %515 = memref.load %arg1[%c62] : memref<97xf32, #tpu.memory_space<smem>>
    %516 = vector.broadcast %515 : f32 to vector<1x128xf32>
    %517 = arith.addf %514, %516 : vector<1x128xf32>
    %cst_92 = arith.constant 5.000000e-01 : f32
    %518 = vector.broadcast %cst_92 : f32 to vector<1x128xf32>
    %519 = arith.mulf %518, %517 : vector<1x128xf32>
    %520 = math.tanh %519 : vector<1x128xf32>
    %cst_93 = arith.constant 5.000000e-01 : f32
    %521 = vector.broadcast %cst_93 : f32 to vector<1x128xf32>
    %522 = arith.mulf %521, %520 : vector<1x128xf32>
    %cst_94 = arith.constant 5.000000e-01 : f32
    %523 = vector.broadcast %cst_94 : f32 to vector<1x128xf32>
    %524 = arith.addf %522, %523 : vector<1x128xf32>
    %c94 = arith.constant 94 : index
    %525 = memref.load %arg1[%c94] : memref<97xf32, #tpu.memory_space<smem>>
    %526 = vector.broadcast %525 : f32 to vector<1x128xf32>
    %527 = arith.mulf %526, %524 : vector<1x128xf32>
    %528 = arith.addf %511, %527 : vector<1x128xf32>
    %c31 = arith.constant 31 : index
    %529 = memref.load %arg1[%c31] : memref<97xf32, #tpu.memory_space<smem>>
    %530 = vector.broadcast %529 : f32 to vector<1x128xf32>
    %531 = arith.mulf %530, %0 : vector<1x128xf32>
    %c63 = arith.constant 63 : index
    %532 = memref.load %arg1[%c63] : memref<97xf32, #tpu.memory_space<smem>>
    %533 = vector.broadcast %532 : f32 to vector<1x128xf32>
    %534 = arith.addf %531, %533 : vector<1x128xf32>
    %cst_95 = arith.constant 5.000000e-01 : f32
    %535 = vector.broadcast %cst_95 : f32 to vector<1x128xf32>
    %536 = arith.mulf %535, %534 : vector<1x128xf32>
    %537 = math.tanh %536 : vector<1x128xf32>
    %cst_96 = arith.constant 5.000000e-01 : f32
    %538 = vector.broadcast %cst_96 : f32 to vector<1x128xf32>
    %539 = arith.mulf %538, %537 : vector<1x128xf32>
    %cst_97 = arith.constant 5.000000e-01 : f32
    %540 = vector.broadcast %cst_97 : f32 to vector<1x128xf32>
    %541 = arith.addf %539, %540 : vector<1x128xf32>
    %c95 = arith.constant 95 : index
    %542 = memref.load %arg1[%c95] : memref<97xf32, #tpu.memory_space<smem>>
    %543 = vector.broadcast %542 : f32 to vector<1x128xf32>
    %544 = arith.mulf %543, %541 : vector<1x128xf32>
    %545 = arith.addf %528, %544 : vector<1x128xf32>
    %c96 = arith.constant 96 : index
    %546 = memref.load %arg1[%c96] : memref<97xf32, #tpu.memory_space<smem>>
    %547 = vector.broadcast %546 : f32 to vector<1x128xf32>
    %548 = arith.addf %545, %547 : vector<1x128xf32>
    %c0_98 = arith.constant 0 : index
    %c0_99 = arith.constant 0 : index
    %549 = vector.load %arg3[%c0_98, %c0_99] : memref<1x128xf32, #tpu.memory_space<vmem>>, vector<1x128xf32>
    tpu.vector_store %arg3[%c0_98, %c0_99], %548 {strides = array<i32>} : memref<1x128xf32, #tpu.memory_space<vmem>>, vector<1x128xf32>,
    return
  }
  func.func @transform_0(%arg0: i32) -> i32 {
    %c0_i32 = arith.constant 0 : i32
    %c0_i32_0 = arith.constant 0 : i32
    return %c0_i32 : i32
  }
  func.func @transform_1(%arg0: i32) -> (i32, i32) {
    %c0_i32 = arith.constant 0 : i32
    %c0_i32_0 = arith.constant 0 : i32
    return %arg0, %c0_i32 : i32, i32
  }
  func.func @transform_2(%arg0: i32) -> (i32, i32) {
    %c0_i32 = arith.constant 0 : i32
    %c0_i32_0 = arith.constant 0 : i32
    return %arg0, %c0_i32 : i32, i32
  }
}

</mosaic_0001>

<llo_original>
// kernel: tpu_custom_call.1
$region0: #{tpu_custom_call.1}
  #allocation0 [shape = 'u32[]', space=smem, size = 0x4, offset = 0x4, fixed_abs, tag = 'smem constant byte address 0x4 - core index']
  #allocation1 [shape = 'u32[144,128]{1,0:T(1,128)}', space=vmem, size = 0x12000, scoped, tag = 'internal scratch']
  %s0 = inlined_call_operand.hbm [shape: f32[97], index: 0, kind: input, shape index: {}]
  %s1 = inlined_call_operand.vmem [shape: f32[1,128], index: 1, kind: input, shape index: {}]
  %s2 = inlined_call_operand.hbm [shape: f32[1,128], index: 2, kind: output, shape index: {}]
  %s3 = sld [smem:[#allocation0]]
  $region22: #{tpu_custom_call.1} parent=0
    _
  %s5 = ssub.s32 1, %s3
  %s6 = scalar_select 0, %s5, %s3
  $region1: #{tpu_custom_call.1} parent=0
    #allocation2 [shape = 'u8[512]{0}', space=smem, size = 0x200, scoped, tag = 'input window, operand 0, single buffered']
    #allocation3 [shape = 's32[1]{0}', space=sflag, size = 0x4, scoped, tag = 'scoped memory for tpu_custom_call.1']
    #allocation4 [shape = 's32[1]{0}', space=sflag, size = 0x4, scoped, tag = 'scoped memory for tpu_custom_call.1']
    #allocation5 [shape = 'u8[512]{0}', space=vmem, size = 0x400, scoped, tag = 'output window, operand 0, single buffered']
    %7 = vsyncpa [#allocation4], 0
    %8 = vsyncpa [#allocation3], 0
    // Predicated region
    $region2: #{tpu_custom_call.1} parent=1 // pred_check
      _
    $region3: #{tpu_custom_call.1} parent=1 // pred_check_branch
      %10 = sbr.rel (0) target = $region5
    $region4: #{tpu_custom_call.1} parent=1 // pred_region
      %s12 = ssub.s32 16, 16
      %13 = vsyncadd [#allocation4], %s12
      %16 = dma.hbm_to_smem %s0, 16, [#allocation2], [#allocation4]
    $region5: #{tpu_custom_call.1} parent=1 // pred_fallthru
      _
    // Predicated region
    $region6: #{tpu_custom_call.1} parent=1 // pred_check
      _
    $region7: #{tpu_custom_call.1} parent=1 // pred_check_branch
      %18 = sbr.rel (0) target = $region9
    $region8: #{tpu_custom_call.1} parent=1 // pred_region
      _
    $region9: #{tpu_custom_call.1} parent=1 // pred_fallthru
      _
    // Predicated region
    $region10: #{tpu_custom_call.1} parent=1 // pred_check
      _
    $region11: #{tpu_custom_call.1} parent=1 // pred_check_branch
      %20 = sbr.rel (0) target = $region13
    $region12: #{tpu_custom_call.1} parent=1 // pred_region
      %21 = dma.done [#allocation4], 16
    $region13: #{tpu_custom_call.1} parent=1 // pred_fallthru
      _
    %22 = sfence
    %v23 = vld [vmem:[%s1] sm:$0x1]
    %s24 = sld [smem:[#allocation2]]
    %v25 = vstv %s24
    %v26 = vmul.f32 %v25, %v23
    %s27 = sld [smem:[#allocation2 + $0x20]]
    %v28 = vstv %s27
    %v29 = vadd.f32 %v26, %v28
    %v30 = vmul.f32 %v29, 0.5
    %v31 = vtanh.pop %v30
    %v32 = vmul.f32 %v31, 0.5
    %v33 = vadd.f32 %v32, 0.5
    %s34 = sld [smem:[#allocation2 + $0x40]]
    %v35 = vstv %s34
    %v36 = vmul.f32 %v35, %v33
    %v37 = vadd.f32 %v36, 0.0
    %s38 = sld [smem:[#allocation2 + $0x1]]
    %v39 = vstv %s38
    %v40 = vmul.f32 %v39, %v23
    %s41 = sld [smem:[#allocation2 + $0x21]]
    %v42 = vstv %s41
    %v43 = vadd.f32 %v40, %v42
    %v44 = vmul.f32 %v43, 0.5
    %v45 = vtanh.pop %v44
    %v46 = vmul.f32 %v45, 0.5
    %v47 = vadd.f32 %v46, 0.5
    %s48 = sld [smem:[#allocation2 + $0x41]]
    %v49 = vstv %s48
    %v50 = vmul.f32 %v49, %v47
    %v51 = vadd.f32 %v37, %v50
    %s52 = sld [smem:[#allocation2 + $0x2]]
    %v53 = vstv %s52
    %v54 = vmul.f32 %v53, %v23
    %s55 = sld [smem:[#allocation2 + $0x22]]
    %v56 = vstv %s55
    %v57 = vadd.f32 %v54, %v56
    %v58 = vmul.f32 %v57, 0.5
    %v59 = vtanh.pop %v58
    %v60 = vmul.f32 %v59, 0.5
    %v61 = vadd.f32 %v60, 0.5
    %s62 = sld [smem:[#allocation2 + $0x42]]
    %v63 = vstv %s62
    %v64 = vmul.f32 %v63, %v61
    %v65 = vadd.f32 %v51, %v64
    %s66 = sld [smem:[#allocation2 + $0x3]]
    %v67 = vstv %s66
    %v68 = vmul.f32 %v67, %v23
    %s69 = sld [smem:[#allocation2 + $0x23]]
    %v70 = vstv %s69
    %v71 = vadd.f32 %v68, %v70
    %v72 = vmul.f32 %v71, 0.5
    %v73 = vtanh.pop %v72
    %v74 = vmul.f32 %v73, 0.5
    %v75 = vadd.f32 %v74, 0.5
    %s76 = sld [smem:[#allocation2 + $0x43]]
    %v77 = vstv %s76
    %v78 = vmul.f32 %v77, %v75
    %v79 = vadd.f32 %v65, %v78
    %s80 = sld [smem:[#allocation2 + $0x4]]
    %v81 = vstv %s80
    %v82 = vmul.f32 %v81, %v23
    %s83 = sld [smem:[#allocation2 + $0x24]]
    %v84 = vstv %s83
    %v85 = vadd.f32 %v82, %v84
    %v86 = vmul.f32 %v85, 0.5
    %v87 = vtanh.pop %v86
    %v88 = vmul.f32 %v87, 0.5
    %v89 = vadd.f32 %v88, 0.5
    %s90 = sld [smem:[#allocation2 + $0x44]]
    %v91 = vstv %s90
    %v92 = vmul.f32 %v91, %v89
    %v93 = vadd.f32 %v79, %v92
    %s94 = sld [smem:[#allocation2 + $0x5]]
    %v95 = vstv %s94
    %v96 = vmul.f32 %v95, %v23
    %s97 = sld [smem:[#allocation2 + $0x25]]
    %v98 = vstv %s97
    %v99 = vadd.f32 %v96, %v98
    %v100 = vmul.f32 %v99, 0.5
    %v101 = vtanh.pop %v100
    %v102 = vmul.f32 %v101, 0.5
    %v103 = vadd.f32 %v102, 0.5
    %s104 = sld [smem:[#allocation2 + $0x45]]
    %v105 = vstv %s104
    %v106 = vmul.f32 %v105, %v103
    %v107 = vadd.f32 %v93, %v106
    %s108 = sld [smem:[#allocation2 + $0x6]]
    %v109 = vstv %s108
    %v110 = vmul.f32 %v109, %v23
    %s111 = sld [smem:[#allocation2 + $0x26]]
    %v112 = vstv %s111
    %v113 = vadd.f32 %v110, %v112
    %v114 = vmul.f32 %v113, 0.5
    %v115 = vtanh.pop %v114
    %v116 = vmul.f32 %v115, 0.5
    %v117 = vadd.f32 %v116, 0.5
    %s118 = sld [smem:[#allocation2 + $0x46]]
    %v119 = vstv %s118
    %v120 = vmul.f32 %v119, %v117
    %v121 = vadd.f32 %v107, %v120
    %s122 = sld [smem:[#allocation2 + $0x7]]
    %v123 = vstv %s122
    %v124 = vmul.f32 %v123, %v23
    %s125 = sld [smem:[#allocation2 + $0x27]]
    %v126 = vstv %s125
    %v127 = vadd.f32 %v124, %v126
    %v128 = vmul.f32 %v127, 0.5
    %v129 = vtanh.pop %v128
    %v130 = vmul.f32 %v129, 0.5
    %v131 = vadd.f32 %v130, 0.5
    %s132 = sld [smem:[#allocation2 + $0x47]]
    %v133 = vstv %s132
    %v134 = vmul.f32 %v133, %v131
    %v135 = vadd.f32 %v121, %v134
    %s136 = sld [smem:[#allocation2 + $0x8]]
    %v137 = vstv %s136
    %v138 = vmul.f32 %v137, %v23
    %s139 = sld [smem:[#allocation2 + $0x28]]
    %v140 = vstv %s139
    %v141 = vadd.f32 %v138, %v140
    %v142 = vmul.f32 %v141, 0.5
    %v143 = vtanh.pop %v142
    %v144 = vmul.f32 %v143, 0.5
    %v145 = vadd.f32 %v144, 0.5
    %s146 = sld [smem:[#allocation2 + $0x48]]
    %v147 = vstv %s146
    %v148 = vmul.f32 %v147, %v145
    %v149 = vadd.f32 %v135, %v148
    %s150 = sld [smem:[#allocation2 + $0x9]]
    %v151 = vstv %s150
    %v152 = vmul.f32 %v151, %v23
    %s153 = sld [smem:[#allocation2 + $0x29]]
    %v154 = vstv %s153
    %v155 = vadd.f32 %v152, %v154
    %v156 = vmul.f32 %v155, 0.5
    %v157 = vtanh.pop %v156
    %v158 = vmul.f32 %v157, 0.5
    %v159 = vadd.f32 %v158, 0.5
    %s160 = sld [smem:[#allocation2 + $0x49]]
    %v161 = vstv %s160
    %v162 = vmul.f32 %v161, %v159
    %v163 = vadd.f32 %v149, %v162
    %s164 = sld [smem:[#allocation2 + $0xa]]
    %v165 = vstv %s164
    %v166 = vmul.f32 %v165, %v23
    %s167 = sld [smem:[#allocation2 + $0x2a]]
    %v168 = vstv %s167
    %v169 = vadd.f32 %v166, %v168
    %v170 = vmul.f32 %v169, 0.5
    %v171 = vtanh.pop %v170
    %v172 = vmul.f32 %v171, 0.5
    %v173 = vadd.f32 %v172, 0.5
    %s174 = sld [smem:[#allocation2 + $0x4a]]
    %v175 = vstv %s174
    %v176 = vmul.f32 %v175, %v173
    %v177 = vadd.f32 %v163, %v176
    %s178 = sld [smem:[#allocation2 + $0xb]]
    %v179 = vstv %s178
    %v180 = vmul.f32 %v179, %v23
    %s181 = sld [smem:[#allocation2 + $0x2b]]
    %v182 = vstv %s181
    %v183 = vadd.f32 %v180, %v182
    %v184 = vmul.f32 %v183, 0.5
    %v185 = vtanh.pop %v184
    %v186 = vmul.f32 %v185, 0.5
    %v187 = vadd.f32 %v186, 0.5
    %s188 = sld [smem:[#allocation2 + $0x4b]]
    %v189 = vstv %s188
    %v190 = vmul.f32 %v189, %v187
    %v191 = vadd.f32 %v177, %v190
    %s192 = sld [smem:[#allocation2 + $0xc]]
    %v193 = vstv %s192
    %v194 = vmul.f32 %v193, %v23
    %s195 = sld [smem:[#allocation2 + $0x2c]]
    %v196 = vstv %s195
    %v197 = vadd.f32 %v194, %v196
    %v198 = vmul.f32 %v197, 0.5
    %v199 = vtanh.pop %v198
    %v200 = vmul.f32 %v199, 0.5
    %v201 = vadd.f32 %v200, 0.5
    %s202 = sld [smem:[#allocation2 + $0x4c]]
    %v203 = vstv %s202
    %v204 = vmul.f32 %v203, %v201
    %v205 = vadd.f32 %v191, %v204
    %s206 = sld [smem:[#allocation2 + $0xd]]
    %v207 = vstv %s206
    %v208 = vmul.f32 %v207, %v23
    %s209 = sld [smem:[#allocation2 + $0x2d]]
    %v210 = vstv %s209
    %v211 = vadd.f32 %v208, %v210
    %v212 = vmul.f32 %v211, 0.5
    %v213 = vtanh.pop %v212
    %v214 = vmul.f32 %v213, 0.5
    %v215 = vadd.f32 %v214, 0.5
    %s216 = sld [smem:[#allocation2 + $0x4d]]
    %v217 = vstv %s216
    %v218 = vmul.f32 %v217, %v215
    %v219 = vadd.f32 %v205, %v218
    %s220 = sld [smem:[#allocation2 + $0xe]]
    %v221 = vstv %s220
    %v222 = vmul.f32 %v221, %v23
    %s223 = sld [smem:[#allocation2 + $0x2e]]
    %v224 = vstv %s223
    %v225 = vadd.f32 %v222, %v224
    %v226 = vmul.f32 %v225, 0.5
    %v227 = vtanh.pop %v226
    %v228 = vmul.f32 %v227, 0.5
    %v229 = vadd.f32 %v228, 0.5
    %s230 = sld [smem:[#allocation2 + $0x4e]]
    %v231 = vstv %s230
    %v232 = vmul.f32 %v231, %v229
    %v233 = vadd.f32 %v219, %v232
    %s234 = sld [smem:[#allocation2 + $0xf]]
    %v235 = vstv %s234
    %v236 = vmul.f32 %v235, %v23
    %s237 = sld [smem:[#allocation2 + $0x2f]]
    %v238 = vstv %s237
    %v239 = vadd.f32 %v236, %v238
    %v240 = vmul.f32 %v239, 0.5
    %v241 = vtanh.pop %v240
    %v242 = vmul.f32 %v241, 0.5
    %v243 = vadd.f32 %v242, 0.5
    %s244 = sld [smem:[#allocation2 + $0x4f]]
    %v245 = vstv %s244
    %v246 = vmul.f32 %v245, %v243
    %v247 = vadd.f32 %v233, %v246
    %s248 = sld [smem:[#allocation2 + $0x10]]
    %v249 = vstv %s248
    %v250 = vmul.f32 %v249, %v23
    %s251 = sld [smem:[#allocation2 + $0x30]]
    %v252 = vstv %s251
    %v253 = vadd.f32 %v250, %v252
    %v254 = vmul.f32 %v253, 0.5
    %v255 = vtanh.pop %v254
    %v256 = vmul.f32 %v255, 0.5
    %v257 = vadd.f32 %v256, 0.5
    %s258 = sld [smem:[#allocation2 + $0x50]]
    %v259 = vstv %s258
    %v260 = vmul.f32 %v259, %v257
    %v261 = vadd.f32 %v247, %v260
    %s262 = sld [smem:[#allocation2 + $0x11]]
    %v263 = vstv %s262
    %v264 = vmul.f32 %v263, %v23
    %s265 = sld [smem:[#allocation2 + $0x31]]
    %v266 = vstv %s265
    %v267 = vadd.f32 %v264, %v266
    %v268 = vmul.f32 %v267, 0.5
    %v269 = vtanh.pop %v268
    %v270 = vmul.f32 %v269, 0.5
    %v271 = vadd.f32 %v270, 0.5
    %s272 = sld [smem:[#allocation2 + $0x51]]
    %v273 = vstv %s272
    %v274 = vmul.f32 %v273, %v271
    %v275 = vadd.f32 %v261, %v274
    %s276 = sld [smem:[#allocation2 + $0x12]]
    %v277 = vstv %s276
    %v278 = vmul.f32 %v277, %v23
    %s279 = sld [smem:[#allocation2 + $0x32]]
    %v280 = vstv %s279
    %v281 = vadd.f32 %v278, %v280
    %v282 = vmul.f32 %v281, 0.5
    %v283 = vtanh.pop %v282
    %v284 = vmul.f32 %v283, 0.5
    %v285 = vadd.f32 %v284, 0.5
    %s286 = sld [smem:[#allocation2 + $0x52]]
    %v287 = vstv %s286
    %v288 = vmul.f32 %v287, %v285
    %v289 = vadd.f32 %v275, %v288
    %s290 = sld [smem:[#allocation2 + $0x13]]
    %v291 = vstv %s290
    %v292 = vmul.f32 %v291, %v23
    %s293 = sld [smem:[#allocation2 + $0x33]]
    %v294 = vstv %s293
    %v295 = vadd.f32 %v292, %v294
    %v296 = vmul.f32 %v295, 0.5
    %v297 = vtanh.pop %v296
    %v298 = vmul.f32 %v297, 0.5
    %v299 = vadd.f32 %v298, 0.5
    %s300 = sld [smem:[#allocation2 + $0x53]]
    %v301 = vstv %s300
    %v302 = vmul.f32 %v301, %v299
    %v303 = vadd.f32 %v289, %v302
    %s304 = sld [smem:[#allocation2 + $0x14]]
    %v305 = vstv %s304
    %v306 = vmul.f32 %v305, %v23
    %s307 = sld [smem:[#allocation2 + $0x34]]
    %v308 = vstv %s307
    %v309 = vadd.f32 %v306, %v308
    %v310 = vmul.f32 %v309, 0.5
    %v311 = vtanh.pop %v310
    %v312 = vmul.f32 %v311, 0.5
    %v313 = vadd.f32 %v312, 0.5
    %s314 = sld [smem:[#allocation2 + $0x54]]
    %v315 = vstv %s314
    %v316 = vmul.f32 %v315, %v313
    %v317 = vadd.f32 %v303, %v316
    %s318 = sld [smem:[#allocation2 + $0x15]]
    %v319 = vstv %s318
    %v320 = vmul.f32 %v319, %v23
    %s321 = sld [smem:[#allocation2 + $0x35]]
    %v322 = vstv %s321
    %v323 = vadd.f32 %v320, %v322
    %v324 = vmul.f32 %v323, 0.5
    %v325 = vtanh.pop %v324
    %v326 = vmul.f32 %v325, 0.5
    %v327 = vadd.f32 %v326, 0.5
    %s328 = sld [smem:[#allocation2 + $0x55]]
    %v329 = vstv %s328
    %v330 = vmul.f32 %v329, %v327
    %v331 = vadd.f32 %v317, %v330
    %s332 = sld [smem:[#allocation2 + $0x16]]
    %v333 = vstv %s332
    %v334 = vmul.f32 %v333, %v23
    %s335 = sld [smem:[#allocation2 + $0x36]]
    %v336 = vstv %s335
    %v337 = vadd.f32 %v334, %v336
    %v338 = vmul.f32 %v337, 0.5
    %v339 = vtanh.pop %v338
    %v340 = vmul.f32 %v339, 0.5
    %v341 = vadd.f32 %v340, 0.5
    %s342 = sld [smem:[#allocation2 + $0x56]]
    %v343 = vstv %s342
    %v344 = vmul.f32 %v343, %v341
    %v345 = vadd.f32 %v331, %v344
    %s346 = sld [smem:[#allocation2 + $0x17]]
    %v347 = vstv %s346
    %v348 = vmul.f32 %v347, %v23
    %s349 = sld [smem:[#allocation2 + $0x37]]
    %v350 = vstv %s349
    %v351 = vadd.f32 %v348, %v350
    %v352 = vmul.f32 %v351, 0.5
    %v353 = vtanh.pop %v352
    %v354 = vmul.f32 %v353, 0.5
    %v355 = vadd.f32 %v354, 0.5
    %s356 = sld [smem:[#allocation2 + $0x57]]
    %v357 = vstv %s356
    %v358 = vmul.f32 %v357, %v355
    %v359 = vadd.f32 %v345, %v358
    %s360 = sld [smem:[#allocation2 + $0x18]]
    %v361 = vstv %s360
    %v362 = vmul.f32 %v361, %v23
    %s363 = sld [smem:[#allocation2 + $0x38]]
    %v364 = vstv %s363
    %v365 = vadd.f32 %v362, %v364
    %v366 = vmul.f32 %v365, 0.5
    %v367 = vtanh.pop %v366
    %v368 = vmul.f32 %v367, 0.5
    %v369 = vadd.f32 %v368, 0.5
    %s370 = sld [smem:[#allocation2 + $0x58]]
    %v371 = vstv %s370
    %v372 = vmul.f32 %v371, %v369
    %v373 = vadd.f32 %v359, %v372
    %s374 = sld [smem:[#allocation2 + $0x19]]
    %v375 = vstv %s374
    %v376 = vmul.f32 %v375, %v23
    %s377 = sld [smem:[#allocation2 + $0x39]]
    %v378 = vstv %s377
    %v379 = vadd.f32 %v376, %v378
    %v380 = vmul.f32 %v379, 0.5
    %v381 = vtanh.pop %v380
    %v382 = vmul.f32 %v381, 0.5
    %v383 = vadd.f32 %v382, 0.5
    %s384 = sld [smem:[#allocation2 + $0x59]]
    %v385 = vstv %s384
    %v386 = vmul.f32 %v385, %v383
    %v387 = vadd.f32 %v373, %v386
    %s388 = sld [smem:[#allocation2 + $0x1a]]
    %v389 = vstv %s388
    %v390 = vmul.f32 %v389, %v23
    %s391 = sld [smem:[#allocation2 + $0x3a]]
    %v392 = vstv %s391
    %v393 = vadd.f32 %v390, %v392
    %v394 = vmul.f32 %v393, 0.5
    %v395 = vtanh.pop %v394
    %v396 = vmul.f32 %v395, 0.5
    %v397 = vadd.f32 %v396, 0.5
    %s398 = sld [smem:[#allocation2 + $0x5a]]
    %v399 = vstv %s398
    %v400 = vmul.f32 %v399, %v397
    %v401 = vadd.f32 %v387, %v400
    %s402 = sld [smem:[#allocation2 + $0x1b]]
    %v403 = vstv %s402
    %v404 = vmul.f32 %v403, %v23
    %s405 = sld [smem:[#allocation2 + $0x3b]]
    %v406 = vstv %s405
    %v407 = vadd.f32 %v404, %v406
    %v408 = vmul.f32 %v407, 0.5
    %v409 = vtanh.pop %v408
    %v410 = vmul.f32 %v409, 0.5
    %v411 = vadd.f32 %v410, 0.5
    %s412 = sld [smem:[#allocation2 + $0x5b]]
    %v413 = vstv %s412
    %v414 = vmul.f32 %v413, %v411
    %v415 = vadd.f32 %v401, %v414
    %s416 = sld [smem:[#allocation2 + $0x1c]]
    %v417 = vstv %s416
    %v418 = vmul.f32 %v417, %v23
    %s419 = sld [smem:[#allocation2 + $0x3c]]
    %v420 = vstv %s419
    %v421 = vadd.f32 %v418, %v420
    %v422 = vmul.f32 %v421, 0.5
    %v423 = vtanh.pop %v422
    %v424 = vmul.f32 %v423, 0.5
    %v425 = vadd.f32 %v424, 0.5
    %s426 = sld [smem:[#allocation2 + $0x5c]]
    %v427 = vstv %s426
    %v428 = vmul.f32 %v427, %v425
    %v429 = vadd.f32 %v415, %v428
    %s430 = sld [smem:[#allocation2 + $0x1d]]
    %v431 = vstv %s430
    %v432 = vmul.f32 %v431, %v23
    %s433 = sld [smem:[#allocation2 + $0x3d]]
    %v434 = vstv %s433
    %v435 = vadd.f32 %v432, %v434
    %v436 = vmul.f32 %v435, 0.5
    %v437 = vtanh.pop %v436
    %v438 = vmul.f32 %v437, 0.5
    %v439 = vadd.f32 %v438, 0.5
    %s440 = sld [smem:[#allocation2 + $0x5d]]
    %v441 = vstv %s440
    %v442 = vmul.f32 %v441, %v439
    %v443 = vadd.f32 %v429, %v442
    %s444 = sld [smem:[#allocation2 + $0x1e]]
    %v445 = vstv %s444
    %v446 = vmul.f32 %v445, %v23
    %s447 = sld [smem:[#allocation2 + $0x3e]]
    %v448 = vstv %s447
    %v449 = vadd.f32 %v446, %v448
    %v450 = vmul.f32 %v449, 0.5
    %v451 = vtanh.pop %v450
    %v452 = vmul.f32 %v451, 0.5
    %v453 = vadd.f32 %v452, 0.5
    %s454 = sld [smem:[#allocation2 + $0x5e]]
    %v455 = vstv %s454
    %v456 = vmul.f32 %v455, %v453
    %v457 = vadd.f32 %v443, %v456
    %s458 = sld [smem:[#allocation2 + $0x1f]]
    %v459 = vstv %s458
    %v460 = vmul.f32 %v459, %v23
    %s461 = sld [smem:[#allocation2 + $0x3f]]
    %v462 = vstv %s461
    %v463 = vadd.f32 %v460, %v462
    %v464 = vmul.f32 %v463, 0.5
    %v465 = vtanh.pop %v464
    %v466 = vmul.f32 %v465, 0.5
    %v467 = vadd.f32 %v466, 0.5
    %s468 = sld [smem:[#allocation2 + $0x5f]]
    %v469 = vstv %s468
    %v470 = vmul.f32 %v469, %v467
    %v471 = vadd.f32 %v457, %v470
    %s472 = sld [smem:[#allocation2 + $0x60]]
    %v473 = vstv %s472
    %v474 = vadd.f32 %v471, %v473
    %475 = vst [vmem:[#allocation5] sm:$0x1] %v474
    // Predicated region
    $region14: #{tpu_custom_call.1} parent=1 // pred_check
      _
    $region15: #{tpu_custom_call.1} parent=1 // pred_check_branch
      %477 = sbr.rel (0) target = $region17
    $region16: #{tpu_custom_call.1} parent=1 // pred_region
      %s479 = ssub.s32 16, 16
      %480 = vsyncadd [#allocation3], %s479
      %s482 = sshll.u32 [#allocation5], 4
      %s483 = int_to_ptr.vmem [resolvable:$true] %s482
      %485 = dma.vmem_to_hbm [thread:$0]  %s483, 16, %s2, [#allocation3]
    $region17: #{tpu_custom_call.1} parent=1 // pred_fallthru
      _
    // Predicated region
    $region18: #{tpu_custom_call.1} parent=1 // pred_check
      _
    $region19: #{tpu_custom_call.1} parent=1 // pred_check_branch
      %487 = sbr.rel (0) target = $region21
    $region20: #{tpu_custom_call.1} parent=1 // pred_region
      %488 = dma.done [#allocation3], 16
    $region21: #{tpu_custom_call.1} parent=1 // pred_fallthru
      _
    %489 = vsyncpa [#allocation3], 1
    %490 = vsyncpa [#allocation4], 1

</llo_original>
